<compile_context>
chip_gen: v7x
topology: tpu7x:2x2x1
jax: 0.10.0
libtpu: 0.0.40
codegen_flags: <defaults>
</compile_context>

<pallas_src>
import jax
import jax.numpy as jnp
from jax.experimental import pallas as pl
from jax.experimental.pallas import tpu as pltpu

INPUT_SIZE = 28
HIDDEN = 64
HPAD = 128      # lane-dense padded hidden width
OUT = 10
OUT_PAD = 128   # lane-dense padded output width


def rnn_kernel(x_ref, wih_t_ref, bias_ref, whh_t_ref, wfc_ref, bfc_ref,
               out_ref, xp_ref):
    # x_ref     : (T*B, INPUT_SIZE)  time-major flattened input
    # wih_t_ref : (INPUT_SIZE, HPAD) zero-padded W_ih^T
    # bias_ref  : (1, HPAD)          zero-padded (b_ih + b_hh)
    # whh_t_ref : (HPAD, HPAD)       zero-padded W_hh^T
    # wfc_ref   : (HPAD, OUT_PAD)    zero-padded W_fc^T
    # bfc_ref   : (1, OUT_PAD)       zero-padded b_fc
    # out_ref   : (B, OUT_PAD)
    # xp_ref    : (T*B, HPAD)        VMEM scratch for the input projection
    B = out_ref.shape[0]
    TB = xp_ref.shape[0]
    T = TB // B

    # One batched input projection, off the serial critical path.
    xp_ref[...] = (jnp.dot(x_ref[...], wih_t_ref[...],
                           preferred_element_type=jnp.float32)
                   + bias_ref[...])

    # Hoist the recurrent weight load out of the unrolled loop.
    whh_t = whh_t_ref[...]

    # h_0 = 0, so the first step's recurrent matmul vanishes.
    # Padded hidden lanes stay exactly 0 through tanh (zero rows/cols in whh_t).
    h = jnp.tanh(xp_ref[0:B, :])
    for t in range(1, T):  # static trip count -> fully unrolled
        h = jnp.tanh(xp_ref[t * B:(t + 1) * B, :]
                     + jnp.dot(h, whh_t, preferred_element_type=jnp.float32))

    out_ref[...] = (jnp.dot(h, wfc_ref[...], preferred_element_type=jnp.float32)
                    + bfc_ref[...]).astype(out_ref.dtype)


def prepare_params(w_ih, w_hh, b_ih, b_hh, w_fc, b_fc):
    """Weight-only preprocessing: run ONCE, outside the per-call forward."""
    wih_t_pad = jnp.zeros((INPUT_SIZE, HPAD), jnp.float32).at[:, :HIDDEN].set(
        jnp.transpose(w_ih))
    bias_pad = jnp.zeros((1, HPAD), jnp.float32).at[:, :HIDDEN].set(
        (b_ih + b_hh).reshape(1, HIDDEN))
    whh_t_pad = jnp.zeros((HPAD, HPAD), jnp.float32).at[:HIDDEN, :HIDDEN].set(
        jnp.transpose(w_hh))
    wfc_pad = jnp.zeros((HPAD, OUT_PAD), jnp.float32).at[:HIDDEN, :OUT].set(
        jnp.transpose(w_fc))
    bfc_pad = jnp.zeros((1, OUT_PAD), jnp.float32).at[:, :OUT].set(
        b_fc.reshape(1, OUT))
    return wih_t_pad, bias_pad, whh_t_pad, wfc_pad, bfc_pad


@jax.jit
def rnn_forward(x, wih_t_pad, bias_pad, whh_t_pad, wfc_pad, bfc_pad):
    """x: (B, T, INPUT_SIZE) float32 (batch_first). Returns (B, OUT) float32."""
    B, T, _ = x.shape

    # Time-major, flattened to (T*B, INPUT_SIZE) so the kernel's per-step
    # slices are contiguous sublane-aligned (B, HPAD) tiles.
    xt = jnp.swapaxes(x, 0, 1).reshape(T * B, INPUT_SIZE)

    out_pad = pl.pallas_call(
        rnn_kernel,
        out_shape=jax.ShapeDtypeStruct((B, OUT_PAD), jnp.float32),
        grid=(1,),
        in_specs=[
            pl.BlockSpec((T * B, INPUT_SIZE), lambda i: (0, 0)),
            pl.BlockSpec((INPUT_SIZE, HPAD), lambda i: (0, 0)),
            pl.BlockSpec((1, HPAD), lambda i: (0, 0)),
            pl.BlockSpec((HPAD, HPAD), lambda i: (0, 0)),
            pl.BlockSpec((HPAD, OUT_PAD), lambda i: (0, 0)),
            pl.BlockSpec((1, OUT_PAD), lambda i: (0, 0)),
        ],
        out_specs=pl.BlockSpec((B, OUT_PAD), lambda i: (0, 0)),
        scratch_shapes=[pltpu.VMEM((T * B, HPAD), jnp.float32)],
        compiler_params=pltpu.CompilerParams(
            dimension_semantics=("arbitrary",)),
    )(xt, wih_t_pad, bias_pad, whh_t_pad, wfc_pad, bfc_pad)

    return out_pad[:, :OUT]


def _reference(x, w_ih, w_hh, b_ih, b_hh, w_fc, b_fc):
    B, T, _ = x.shape
    h = jnp.zeros((B, HIDDEN), jnp.float32)
    for t in range(T):
        h = jnp.tanh(x[:, t, :] @ w_ih.T + b_ih + h @ w_hh.T + b_hh)
    return h @ w_fc.T + b_fc


if __name__ == "__main__":
    key = jax.random.PRNGKey(0)
    kx, k1, k2, k3, k4, k5, k6 = jax.random.split(key, 7)

    B, T = 8, 8
    x = jax.random.normal(kx, (B, T, INPUT_SIZE), jnp.float32)

    # PyTorch-style init: U(-1/sqrt(hidden), 1/sqrt(hidden))
    s = 1.0 / jnp.sqrt(float(HIDDEN))
    w_ih = jax.random.uniform(k1, (HIDDEN, INPUT_SIZE), jnp.float32, -s, s)
    w_hh = jax.random.uniform(k2, (HIDDEN, HIDDEN), jnp.float32, -s, s)
    b_ih = jax.random.uniform(k3, (HIDDEN,), jnp.float32, -s, s)
    b_hh = jax.random.uniform(k4, (HIDDEN,), jnp.float32, -s, s)
    w_fc = jax.random.uniform(k5, (OUT, HIDDEN), jnp.float32, -s, s)
    b_fc = jax.random.uniform(k6, (OUT,), jnp.float32, -s, s)

    params = prepare_params(w_ih, w_hh, b_ih, b_hh, w_fc, b_fc)

    out = rnn_forward(x, *params)
    jax.block_until_ready(out)

    ref = _reference(x, w_ih, w_hh, b_ih, b_hh, w_fc, b_fc)
    assert out.shape == (B, OUT)
    assert jnp.allclose(out, ref, atol=1e-5, rtol=1e-5)
    print("KERNEL_OK")
</pallas_src>

<mosaic_0001>
module attributes {stable_mosaic.version = 11 : i64} {
  func.func @rnn_kernel(%arg0: i32, %arg1: memref<64x28xf32, #tpu.memory_space<vmem>>, %arg2: memref<28x128xf32, #tpu.memory_space<vmem>>, %arg3: memref<1x128xf32, #tpu.memory_space<vmem>>, %arg4: memref<128x128xf32, #tpu.memory_space<vmem>>, %arg5: memref<128x128xf32, #tpu.memory_space<vmem>>, %arg6: memref<1x128xf32, #tpu.memory_space<vmem>>, %arg7: memref<8x128xf32, #tpu.memory_space<vmem>>, %arg8: memref<64x128xf32, #tpu.memory_space<vmem>>) attributes {dimension_semantics = [#tpu.dimension_semantics<arbitrary>], iteration_bounds = array<i64: 1>, scalar_prefetch = 0 : i64, scratch_operands = 1 : i64, tpu.core_type = #tpu.core_type<tc>, window_params = [{pipeline_mode = #tpu.pipeline_mode<synchronous>, transform_indices = @transform_0, window_bounds = array<i64: 64, 28>}, {pipeline_mode = #tpu.pipeline_mode<synchronous>, transform_indices = @transform_1, window_bounds = array<i64: 28, 128>}, {pipeline_mode = #tpu.pipeline_mode<synchronous>, transform_indices = @transform_2, window_bounds = array<i64: 1, 128>}, {pipeline_mode = #tpu.pipeline_mode<synchronous>, transform_indices = @transform_3, window_bounds = array<i64: 128, 128>}, {pipeline_mode = #tpu.pipeline_mode<synchronous>, transform_indices = @transform_4, window_bounds = array<i64: 128, 128>}, {pipeline_mode = #tpu.pipeline_mode<synchronous>, transform_indices = @transform_5, window_bounds = array<i64: 1, 128>}, {pipeline_mode = #tpu.pipeline_mode<synchronous>, transform_indices = @transform_6, window_bounds = array<i64: 8, 128>}]} {
    %c0 = arith.constant 0 : index
    %c0_0 = arith.constant 0 : index
    %0 = vector.load %arg1[%c0, %c0_0] : memref<64x28xf32, #tpu.memory_space<vmem>>, vector<64x28xf32>
    %c0_1 = arith.constant 0 : index
    %c0_2 = arith.constant 0 : index
    %1 = vector.load %arg2[%c0_1, %c0_2] : memref<28x128xf32, #tpu.memory_space<vmem>>, vector<28x128xf32>
    %cst = arith.constant dense<0.000000e+00> : vector<64x128xf32>
    %2 = tpu.matmul %0, %1, %cst {dimension_numbers = #tpu.dot_dimension_numbers<[1], [0], [0], [1], [0, 0, 1, 1], [], []>} : vector<64x28xf32>, vector<28x128xf32>, vector<64x128xf32> -> vector<64x128xf32>
    %c0_3 = arith.constant 0 : index
    %c0_4 = arith.constant 0 : index
    %3 = vector.load %arg3[%c0_3, %c0_4] : memref<1x128xf32, #tpu.memory_space<vmem>>, vector<1x128xf32>
    %4 = vector.broadcast %3 : vector<1x128xf32> to vector<64x128xf32>
    %5 = arith.addf %2, %4 : vector<64x128xf32>
    %c0_5 = arith.constant 0 : index
    %c0_6 = arith.constant 0 : index
    %6 = vector.load %arg8[%c0_5, %c0_6] : memref<64x128xf32, #tpu.memory_space<vmem>>, vector<64x128xf32>
    tpu.vector_store %arg8[%c0_5, %c0_6], %5 {strides = array<i32>} : memref<64x128xf32, #tpu.memory_space<vmem>>, vector<64x128xf32>,
    %c0_7 = arith.constant 0 : index
    %c0_8 = arith.constant 0 : index
    %7 = vector.load %arg4[%c0_7, %c0_8] : memref<128x128xf32, #tpu.memory_space<vmem>>, vector<128x128xf32>
    %c0_9 = arith.constant 0 : index
    %c0_10 = arith.constant 0 : index
    %8 = vector.load %arg8[%c0_9, %c0_10] : memref<64x128xf32, #tpu.memory_space<vmem>>, vector<8x128xf32>
    %9 = math.tanh %8 : vector<8x128xf32>
    %c8 = arith.constant 8 : index
    %c0_11 = arith.constant 0 : index
    %10 = vector.load %arg8[%c8, %c0_11] : memref<64x128xf32, #tpu.memory_space<vmem>>, vector<8x128xf32>
    %cst_12 = arith.constant dense<0.000000e+00> : vector<8x128xf32>
    %11 = tpu.matmul %9, %7, %cst_12 {dimension_numbers = #tpu.dot_dimension_numbers<[1], [0], [0], [1], [0, 0, 1, 1], [], []>} : vector<8x128xf32>, vector<128x128xf32>, vector<8x128xf32> -> vector<8x128xf32>
    %12 = arith.addf %10, %11 : vector<8x128xf32>
    %13 = math.tanh %12 : vector<8x128xf32>
    %c16 = arith.constant 16 : index
    %c0_13 = arith.constant 0 : index
    %14 = vector.load %arg8[%c16, %c0_13] : memref<64x128xf32, #tpu.memory_space<vmem>>, vector<8x128xf32>
    %cst_14 = arith.constant dense<0.000000e+00> : vector<8x128xf32>
    %15 = tpu.matmul %13, %7, %cst_14 {dimension_numbers = #tpu.dot_dimension_numbers<[1], [0], [0], [1], [0, 0, 1, 1], [], []>} : vector<8x128xf32>, vector<128x128xf32>, vector<8x128xf32> -> vector<8x128xf32>
    %16 = arith.addf %14, %15 : vector<8x128xf32>
    %17 = math.tanh %16 : vector<8x128xf32>
    %c24 = arith.constant 24 : index
    %c0_15 = arith.constant 0 : index
    %18 = vector.load %arg8[%c24, %c0_15] : memref<64x128xf32, #tpu.memory_space<vmem>>, vector<8x128xf32>
    %cst_16 = arith.constant dense<0.000000e+00> : vector<8x128xf32>
    %19 = tpu.matmul %17, %7, %cst_16 {dimension_numbers = #tpu.dot_dimension_numbers<[1], [0], [0], [1], [0, 0, 1, 1], [], []>} : vector<8x128xf32>, vector<128x128xf32>, vector<8x128xf32> -> vector<8x128xf32>
    %20 = arith.addf %18, %19 : vector<8x128xf32>
    %21 = math.tanh %20 : vector<8x128xf32>
    %c32 = arith.constant 32 : index
    %c0_17 = arith.constant 0 : index
    %22 = vector.load %arg8[%c32, %c0_17] : memref<64x128xf32, #tpu.memory_space<vmem>>, vector<8x128xf32>
    %cst_18 = arith.constant dense<0.000000e+00> : vector<8x128xf32>
    %23 = tpu.matmul %21, %7, %cst_18 {dimension_numbers = #tpu.dot_dimension_numbers<[1], [0], [0], [1], [0, 0, 1, 1], [], []>} : vector<8x128xf32>, vector<128x128xf32>, vector<8x128xf32> -> vector<8x128xf32>
    %24 = arith.addf %22, %23 : vector<8x128xf32>
    %25 = math.tanh %24 : vector<8x128xf32>
    %c40 = arith.constant 40 : index
    %c0_19 = arith.constant 0 : index
    %26 = vector.load %arg8[%c40, %c0_19] : memref<64x128xf32, #tpu.memory_space<vmem>>, vector<8x128xf32>
    %cst_20 = arith.constant dense<0.000000e+00> : vector<8x128xf32>
    %27 = tpu.matmul %25, %7, %cst_20 {dimension_numbers = #tpu.dot_dimension_numbers<[1], [0], [0], [1], [0, 0, 1, 1], [], []>} : vector<8x128xf32>, vector<128x128xf32>, vector<8x128xf32> -> vector<8x128xf32>
    %28 = arith.addf %26, %27 : vector<8x128xf32>
    %29 = math.tanh %28 : vector<8x128xf32>
    %c48 = arith.constant 48 : index
    %c0_21 = arith.constant 0 : index
    %30 = vector.load %arg8[%c48, %c0_21] : memref<64x128xf32, #tpu.memory_space<vmem>>, vector<8x128xf32>
    %cst_22 = arith.constant dense<0.000000e+00> : vector<8x128xf32>
    %31 = tpu.matmul %29, %7, %cst_22 {dimension_numbers = #tpu.dot_dimension_numbers<[1], [0], [0], [1], [0, 0, 1, 1], [], []>} : vector<8x128xf32>, vector<128x128xf32>, vector<8x128xf32> -> vector<8x128xf32>
    %32 = arith.addf %30, %31 : vector<8x128xf32>
    %33 = math.tanh %32 : vector<8x128xf32>
    %c56 = arith.constant 56 : index
    %c0_23 = arith.constant 0 : index
    %34 = vector.load %arg8[%c56, %c0_23] : memref<64x128xf32, #tpu.memory_space<vmem>>, vector<8x128xf32>
    %cst_24 = arith.constant dense<0.000000e+00> : vector<8x128xf32>
    %35 = tpu.matmul %33, %7, %cst_24 {dimension_numbers = #tpu.dot_dimension_numbers<[1], [0], [0], [1], [0, 0, 1, 1], [], []>} : vector<8x128xf32>, vector<128x128xf32>, vector<8x128xf32> -> vector<8x128xf32>
    %36 = arith.addf %34, %35 : vector<8x128xf32>
    %37 = math.tanh %36 : vector<8x128xf32>
    %c0_25 = arith.constant 0 : index
    %c0_26 = arith.constant 0 : index
    %38 = vector.load %arg5[%c0_25, %c0_26] : memref<128x128xf32, #tpu.memory_space<vmem>>, vector<128x128xf32>
    %cst_27 = arith.constant dense<0.000000e+00> : vector<8x128xf32>
    %39 = tpu.matmul %37, %38, %cst_27 {dimension_numbers = #tpu.dot_dimension_numbers<[1], [0], [0], [1], [0, 0, 1, 1], [], []>} : vector<8x128xf32>, vector<128x128xf32>, vector<8x128xf32> -> vector<8x128xf32>
    %c0_28 = arith.constant 0 : index
    %c0_29 = arith.constant 0 : index
    %40 = vector.load %arg6[%c0_28, %c0_29] : memref<1x128xf32, #tpu.memory_space<vmem>>, vector<1x128xf32>
    %41 = vector.broadcast %40 : vector<1x128xf32> to vector<8x128xf32>
    %42 = arith.addf %39, %41 : vector<8x128xf32>
    %c0_30 = arith.constant 0 : index
    %c0_31 = arith.constant 0 : index
    %43 = vector.load %arg7[%c0_30, %c0_31] : memref<8x128xf32, #tpu.memory_space<vmem>>, vector<8x128xf32>
    tpu.vector_store %arg7[%c0_30, %c0_31], %42 {strides = array<i32>} : memref<8x128xf32, #tpu.memory_space<vmem>>, vector<8x128xf32>,
    return
  }
  func.func @transform_0(%arg0: i32) -> (i32, i32) {
    %c0_i32 = arith.constant 0 : i32
    %c0_i32_0 = arith.constant 0 : i32
    %c0_i32_1 = arith.constant 0 : i32
    return %c0_i32, %c0_i32_0 : i32, i32
  }
  func.func @transform_1(%arg0: i32) -> (i32, i32) {
    %c0_i32 = arith.constant 0 : i32
    %c0_i32_0 = arith.constant 0 : i32
    %c0_i32_1 = arith.constant 0 : i32
    return %c0_i32, %c0_i32_0 : i32, i32
  }
  func.func @transform_2(%arg0: i32) -> (i32, i32) {
    %c0_i32 = arith.constant 0 : i32
    %c0_i32_0 = arith.constant 0 : i32
    %c0_i32_1 = arith.constant 0 : i32
    return %c0_i32, %c0_i32_0 : i32, i32
  }
  func.func @transform_3(%arg0: i32) -> (i32, i32) {
    %c0_i32 = arith.constant 0 : i32
    %c0_i32_0 = arith.constant 0 : i32
    %c0_i32_1 = arith.constant 0 : i32
    return %c0_i32, %c0_i32_0 : i32, i32
  }
  func.func @transform_4(%arg0: i32) -> (i32, i32) {
    %c0_i32 = arith.constant 0 : i32
    %c0_i32_0 = arith.constant 0 : i32
    %c0_i32_1 = arith.constant 0 : i32
    return %c0_i32, %c0_i32_0 : i32, i32
  }
  func.func @transform_5(%arg0: i32) -> (i32, i32) {
    %c0_i32 = arith.constant 0 : i32
    %c0_i32_0 = arith.constant 0 : i32
    %c0_i32_1 = arith.constant 0 : i32
    return %c0_i32, %c0_i32_0 : i32, i32
  }
  func.func @transform_6(%arg0: i32) -> (i32, i32) {
    %c0_i32 = arith.constant 0 : i32
    %c0_i32_0 = arith.constant 0 : i32
    %c0_i32_1 = arith.constant 0 : i32
    return %c0_i32, %c0_i32_0 : i32, i32
  }
}

</mosaic_0001>

<llo_original>
// kernel: rnn_forward.1
$region0: #{rnn_forward.1}
  #allocation0 [shape = 'u32[]', space=smem, size = 0x4, offset = 0x4, fixed_abs, tag = 'smem constant byte address 0x4 - core index']
  #allocation1 [shape = 'u32[144,128]{1,0:T(1,128)}', space=vmem, size = 0x12000, scoped, tag = 'internal scratch']
  #allocation2 [shape = 'f32[64,128]{1,0:T(8,128)}', space=vmem, size = 0x8000, scoped, tag = 'scratch operand']
  %s0 = inlined_call_operand.vmem [shape: f32[64,28], index: 0, kind: input, shape index: {}]
  %s1 = inlined_call_operand.hbm [shape: f32[28,128], index: 1, kind: input, shape index: {}]
  %s2 = inlined_call_operand.vmem [shape: f32[1,128], index: 2, kind: input, shape index: {}]
  %s3 = inlined_call_operand.vmem [shape: f32[128,128], index: 3, kind: input, shape index: {}]
  %s4 = inlined_call_operand.hbm [shape: f32[128,128], index: 4, kind: input, shape index: {}]
  %s5 = inlined_call_operand.vmem [shape: f32[1,128], index: 5, kind: input, shape index: {}]
  %s6 = inlined_call_operand.hbm [shape: f32[8,128], index: 6, kind: output, shape index: {}]
  %s7 = sld [smem:[#allocation0]]
  $region42: #{rnn_forward.1} parent=0
    _
  %s9 = ssub.s32 1, %s7
  %s10 = scalar_select 0, %s9, %s7
  $region1: #{rnn_forward.1} parent=0
    #allocation3 [shape = 'u8[16384]{0}', space=vmem, size = 0x4000, scoped, tag = 'input window, operand 1, single buffered']
    #allocation4 [shape = 's32[1]{0}', space=sflag, size = 0x4, scoped, tag = 'scoped memory for rnn_forward.1']
    #allocation5 [shape = 's32[1]{0}', space=sflag, size = 0x4, scoped, tag = 'scoped memory for rnn_forward.1']
    #allocation6 [shape = 'u8[65536]{0}', space=vmem, size = 0x10000, scoped, tag = 'input window, operand 4, single buffered']
    #allocation7 [shape = 's32[1]{0}', space=sflag, size = 0x4, scoped, tag = 'scoped memory for rnn_forward.1']
    #allocation8 [shape = 'u8[4096]{0}', space=vmem, size = 0x1000, scoped, tag = 'output window, operand 0, single buffered']
    %11 = vsyncpa [#allocation4], 0
    %12 = vsyncpa [#allocation7], 0
    %13 = vsyncpa [#allocation5], 0
    // Predicated region
    $region2: #{rnn_forward.1} parent=1 // pred_check
      _
    $region3: #{rnn_forward.1} parent=1 // pred_check_branch
      %15 = sbr.rel (0) target = $region5
    $region4: #{rnn_forward.1} parent=1 // pred_region
      _
    $region5: #{rnn_forward.1} parent=1 // pred_fallthru
      _
    // Predicated region
    $region6: #{rnn_forward.1} parent=1 // pred_check
      _
    $region7: #{rnn_forward.1} parent=1 // pred_check_branch
      %17 = sbr.rel (0) target = $region9
    $region8: #{rnn_forward.1} parent=1 // pred_region
      %s19 = ssub.s32 512, 512
      %20 = vsyncadd [#allocation4], %s19
      %s21 = sshll.u32 [#allocation3], 4
      %s22 = int_to_ptr.vmem [resolvable:$true] %s21
      %27 = dma.hbm_to_vmem [thread:$0]  %s1, 512, %s22, [#allocation4], 128, 128, 8
    $region9: #{rnn_forward.1} parent=1 // pred_fallthru
      _
    // Predicated region
    $region10: #{rnn_forward.1} parent=1 // pred_check
      _
    $region11: #{rnn_forward.1} parent=1 // pred_check_branch
      %29 = sbr.rel (0) target = $region13
    $region12: #{rnn_forward.1} parent=1 // pred_region
      _
    $region13: #{rnn_forward.1} parent=1 // pred_fallthru
      _
    // Predicated region
    $region14: #{rnn_forward.1} parent=1 // pred_check
      _
    $region15: #{rnn_forward.1} parent=1 // pred_check_branch
      %31 = sbr.rel (0) target = $region17
    $region16: #{rnn_forward.1} parent=1 // pred_region
      _
    $region17: #{rnn_forward.1} parent=1 // pred_fallthru
      _
    // Predicated region
    $region18: #{rnn_forward.1} parent=1 // pred_check
      _
    $region19: #{rnn_forward.1} parent=1 // pred_check_branch
      %33 = sbr.rel (0) target = $region21
    $region20: #{rnn_forward.1} parent=1 // pred_region
      %s35 = ssub.s32 2048, 2048
      %36 = vsyncadd [#allocation7], %s35
      %s37 = sshll.u32 [#allocation6], 4
      %s38 = int_to_ptr.vmem [resolvable:$true] %s37
      %43 = dma.hbm_to_vmem [thread:$0]  %s4, 2048, %s38, [#allocation7], 128, 128, 8
    $region21: #{rnn_forward.1} parent=1 // pred_fallthru
      _
    // Predicated region
    $region22: #{rnn_forward.1} parent=1 // pred_check
      _
    $region23: #{rnn_forward.1} parent=1 // pred_check_branch
      %45 = sbr.rel (0) target = $region25
    $region24: #{rnn_forward.1} parent=1 // pred_region
      _
    $region25: #{rnn_forward.1} parent=1 // pred_fallthru
      _
    // Predicated region
    $region26: #{rnn_forward.1} parent=1 // pred_check
      _
    $region27: #{rnn_forward.1} parent=1 // pred_check_branch
      %47 = sbr.rel (0) target = $region29
    $region28: #{rnn_forward.1} parent=1 // pred_region
      %48 = dma.done [#allocation4], 512
    $region29: #{rnn_forward.1} parent=1 // pred_fallthru
      _
    // Predicated region
    $region30: #{rnn_forward.1} parent=1 // pred_check
      _
    $region31: #{rnn_forward.1} parent=1 // pred_check_branch
      %50 = sbr.rel (0) target = $region33
    $region32: #{rnn_forward.1} parent=1 // pred_region
      %51 = dma.done [#allocation7], 2048
    $region33: #{rnn_forward.1} parent=1 // pred_fallthru
      _
    %v52 = vld [vmem:[%s0] sm:$0xff]
    %v53 = vld [vmem:[%s0 + $0x8] sm:$0xff]
    %v54 = vld [vmem:[%s0 + $0x10] sm:$0xff]
    %v55 = vld [vmem:[%s0 + $0x18] sm:$0xff]
    %v56 = vld [vmem:[%s0 + $0x20] sm:$0xff]
    %v57 = vld [vmem:[%s0 + $0x28] sm:$0xff]
    %v58 = vld [vmem:[%s0 + $0x30] sm:$0xff]
    %v59 = vld [vmem:[%s0 + $0x38] sm:$0xff]
    %v60 = vld [vmem:[#allocation3] sm:$0xff]
    %v61 = vld [vmem:[#allocation3 + $0x8] sm:$0xff]
    %v62 = vld [vmem:[#allocation3 + $0x10] sm:$0xff]
    %v63 = vld [vmem:[#allocation3 + $0x18] sm:$0xf]
    %v64 = vld [vmem:[%s2] sm:$0x1]
    %v66 = vlaneseq
    %v67 = vshrl.u32 %v66, 7
    %v68 = vsub.s32 0, %v67
    %v69 = vrot.slane %v64, %v68
    %vm71 = vcmask 228352
    %v73 = vsel %vm71, %v52, 0
    %v76 = vsel %vm71, %v53, 0
    %v79 = vsel %vm71, %v54, 0
    %v82 = vsel %vm71, %v55, 0
    %v85 = vsel %vm71, %v56, 0
    %v88 = vsel %vm71, %v57, 0
    %v91 = vsel %vm71, %v58, 0
    %v94 = vsel %vm71, %v59, 0
    %vm96 = vcmask 1043456
    %v98 = vsel %vm96, %v63, 0
    %100 = vmatprep.subr.mxu0 0.0
    %101 = vmatpush1.msra.mxu0 %v60
    %102 = vmatprep.subr.mxu0 0.0
    %103 = vmatpush1.msra.mxu0 %v61
    %104 = vmatprep.subr.mxu0 0.0
    %105 = vmatpush1.msra.mxu0 %v62
    %106 = vmatprep.subr.mxu0 0.0
    %107 = vmatpush1.msra.mxu0 %v98
    %108 = vmatprep.subr.mxu0 0.0
    %109 = vmatpush1.msra.mxu0 0.0
    %110 = vmatprep.subr.mxu0 0.0
    %111 = vmatpush1.msra.mxu0 0.0
    %112 = vmatprep.subr.mxu0 0.0
    %113 = vmatpush1.msra.mxu0 0.0
    %114 = vmatprep.subr.mxu0 0.0
    %115 = vmatpush1.msra.mxu0 0.0
    %116 = vmatprep.subr.mxu0 0.0
    %117 = vmatpush1.msra.mxu0 0.0
    %118 = vmatprep.subr.mxu0 0.0
    %119 = vmatpush1.msra.mxu0 0.0
    %120 = vmatprep.subr.mxu0 0.0
    %121 = vmatpush1.msra.mxu0 0.0
    %122 = vmatprep.subr.mxu0 0.0
    %123 = vmatpush1.msra.mxu0 0.0
    %124 = vmatprep.subr.mxu0 0.0
    %125 = vmatpush1.msra.mxu0 0.0
    %126 = vmatprep.subr.mxu0 0.0
    %127 = vmatpush1.msra.mxu0 0.0
    %128 = vmatprep.subr.mxu0 0.0
    %129 = vmatpush1.msra.mxu0 0.0
    %130 = vmatprep.subr.mxu0 0.0
    %131 = vmatpush1.msra.mxu0 0.0
    %132 = vmatprep.subr.mxu0 0.0
    %133 = vmatpush1.msra.mxu0 0.0
    %134 = vmatprep.subr.mxu0 0.0
    %135 = vmatpush1.msra.mxu0 0.0
    %136 = vmatprep.subr.mxu0 0.0
    %137 = vmatpush1.msra.mxu0 0.0
    %138 = vmatprep.subr.mxu0 0.0
    %139 = vmatpush1.msra.mxu0 0.0
    %140 = vmatprep.subr.mxu0 0.0
    %141 = vmatpush1.msra.mxu0 0.0
    %142 = vmatprep.subr.mxu0 0.0
    %143 = vmatpush1.msra.mxu0 0.0
    %144 = vmatprep.subr.mxu0 0.0
    %145 = vmatpush1.msra.mxu0 0.0
    %146 = vmatprep.subr.mxu0 0.0
    %147 = vmatpush1.msra.mxu0 0.0
    %148 = vmatprep.subr.mxu0 0.0
    %149 = vmatpush1.msra.mxu0 0.0
    %150 = vmatprep.subr.mxu0 0.0
    %151 = vmatpush1.msra.mxu0 0.0
    %152 = vmatprep.subr.mxu0 0.0
    %153 = vmatpush1.msra.mxu0 0.0
    %154 = vmatprep.subr.mxu0 0.0
    %155 = vmatpush1.msra.mxu0 0.0
    %156 = vmatprep.subr.mxu0 0.0
    %157 = vmatpush1.msra.mxu0 0.0
    %158 = vmatprep.subr.mxu0 0.0
    %159 = vmatpush1.msra.mxu0 0.0
    %160 = vmatprep.subr.mxu0 0.0
    %161 = vmatpush1.msra.mxu0 0.0
    %162 = vmatprep.subr.mxu0 0.0
    %163 = vmatpush1.msra.mxu0 0.0
    %164 = vmatprep.mubr.f32.mxu0 0.0
    %165 = vmatmul.mubr.f32.gmra.mrb[0].mxu0 %v73
    %v166 = vpop.f32.mrb[0].mxu0
    %v167 = vadd.f32 %v69, %v166
    %v168 = vpop.f32.mrb[0].mxu0
    %169 = vmatprep.mubr.f32.mxu0 0.0
    %170 = vmatmul.mubr.f32.gmra.mrb[0].mxu0 %v76
    %v171 = vpop.f32.mrb[0].mxu0
    %v172 = vadd.f32 %v69, %v171
    %v173 = vpop.f32.mrb[0].mxu0
    %174 = vmatprep.mubr.f32.mxu0 0.0
    %175 = vmatmul.mubr.f32.gmra.mrb[0].mxu0 %v79
    %v176 = vpop.f32.mrb[0].mxu0
    %v177 = vadd.f32 %v69, %v176
    %v178 = vpop.f32.mrb[0].mxu0
    %179 = vmatprep.mubr.f32.mxu0 0.0
    %180 = vmatmul.mubr.f32.gmra.mrb[0].mxu0 %v82
    %v181 = vpop.f32.mrb[0].mxu0
    %v182 = vadd.f32 %v69, %v181
    %v183 = vpop.f32.mrb[0].mxu0
    %184 = vmatprep.mubr.f32.mxu0 0.0
    %185 = vmatmul.mubr.f32.gmra.mrb[0].mxu0 %v85
    %v186 = vpop.f32.mrb[0].mxu0
    %v187 = vadd.f32 %v69, %v186
    %v188 = vpop.f32.mrb[0].mxu0
    %189 = vmatprep.mubr.f32.mxu0 0.0
    %190 = vmatmul.mubr.f32.gmra.mrb[0].mxu0 %v88
    %v191 = vpop.f32.mrb[0].mxu0
    %v192 = vadd.f32 %v69, %v191
    %v193 = vpop.f32.mrb[0].mxu0
    %194 = vmatprep.mubr.f32.mxu0 0.0
    %195 = vmatmul.mubr.f32.gmra.mrb[0].mxu0 %v91
    %v196 = vpop.f32.mrb[0].mxu0
    %v197 = vadd.f32 %v69, %v196
    %v198 = vpop.f32.mrb[0].mxu0
    %199 = vmatprep.mubr.f32.mxu0 0.0
    %200 = vmatmul.mubr.f32.gmra.mrb[0].mxu0 %v94
    %v201 = vpop.f32.mrb[0].mxu0
    %v202 = vadd.f32 %v69, %v201
    %v203 = vpop.f32.mrb[0].mxu0
    %204 = vdwg.mxu0
    %205 = vst [vmem:[#allocation2] sm:$0xff] %v167
    %206 = vst [vmem:[#allocation2 + $0x8] sm:$0xff] %v172
    %207 = vst [vmem:[#allocation2 + $0x10] sm:$0xff] %v177
    %208 = vst [vmem:[#allocation2 + $0x18] sm:$0xff] %v182
    %209 = vst [vmem:[#allocation2 + $0x20] sm:$0xff] %v187
    %210 = vst [vmem:[#allocation2 + $0x28] sm:$0xff] %v192
    %211 = vst [vmem:[#allocation2 + $0x30] sm:$0xff] %v197
    %212 = vst [vmem:[#allocation2 + $0x38] sm:$0xff] %v202
    %v213 = vld [vmem:[%s3] sm:$0xff]
    %v214 = vld [vmem:[%s3 + $0x8] sm:$0xff]
    %v215 = vld [vmem:[%s3 + $0x10] sm:$0xff]
    %v216 = vld [vmem:[%s3 + $0x18] sm:$0xff]
    %v217 = vld [vmem:[%s3 + $0x20] sm:$0xff]
    %v218 = vld [vmem:[%s3 + $0x28] sm:$0xff]
    %v219 = vld [vmem:[%s3 + $0x30] sm:$0xff]
    %v220 = vld [vmem:[%s3 + $0x38] sm:$0xff]
    %v221 = vld [vmem:[%s3 + $0x40] sm:$0xff]
    %v222 = vld [vmem:[%s3 + $0x48] sm:$0xff]
    %v223 = vld [vmem:[%s3 + $0x50] sm:$0xff]
    %v224 = vld [vmem:[%s3 + $0x58] sm:$0xff]
    %v225 = vld [vmem:[%s3 + $0x60] sm:$0xff]
    %v226 = vld [vmem:[%s3 + $0x68] sm:$0xff]
    %v227 = vld [vmem:[%s3 + $0x70] sm:$0xff]
    %v228 = vld [vmem:[%s3 + $0x78] sm:$0xff]
    %v229 = vld [vmem:[#allocation2] sm:$0xff]
    %v230 = vtanh.pop %v229
    %v231 = vld [vmem:[#allocation2 + $0x8] sm:$0xff]
    %232 = vmatprep.subr.mxu0 0.0
    %233 = vmatpush1.msra.mxu0 %v213
    %234 = vmatprep.subr.mxu0 0.0
    %235 = vmatpush1.msra.mxu0 %v214
    %236 = vmatprep.subr.mxu0 0.0
    %237 = vmatpush1.msra.mxu0 %v215
    %238 = vmatprep.subr.mxu0 0.0
    %239 = vmatpush1.msra.mxu0 %v216
    %240 = vmatprep.subr.mxu0 0.0
    %241 = vmatpush1.msra.mxu0 %v217
    %242 = vmatprep.subr.mxu0 0.0
    %243 = vmatpush1.msra.mxu0 %v218
    %244 = vmatprep.subr.mxu0 0.0
    %245 = vmatpush1.msra.mxu0 %v219
    %246 = vmatprep.subr.mxu0 0.0
    %247 = vmatpush1.msra.mxu0 %v220
    %248 = vmatprep.subr.mxu0 0.0
    %249 = vmatpush1.msra.mxu0 %v221
    %250 = vmatprep.subr.mxu0 0.0
    %251 = vmatpush1.msra.mxu0 %v222
    %252 = vmatprep.subr.mxu0 0.0
    %253 = vmatpush1.msra.mxu0 %v223
    %254 = vmatprep.subr.mxu0 0.0
    %255 = vmatpush1.msra.mxu0 %v224
    %256 = vmatprep.subr.mxu0 0.0
    %257 = vmatpush1.msra.mxu0 %v225
    %258 = vmatprep.subr.mxu0 0.0
    %259 = vmatpush1.msra.mxu0 %v226
    %260 = vmatprep.subr.mxu0 0.0
    %261 = vmatpush1.msra.mxu0 %v227
    %262 = vmatprep.subr.mxu0 0.0
    %263 = vmatpush1.msra.mxu0 %v228
    %264 = vmatprep.subr.mxu0 0.0
    %265 = vmatpush1.msra.mxu0 0.0
    %266 = vmatprep.subr.mxu0 0.0
    %267 = vmatpush1.msra.mxu0 0.0
    %268 = vmatprep.subr.mxu0 0.0
    %269 = vmatpush1.msra.mxu0 0.0
    %270 = vmatprep.subr.mxu0 0.0
    %271 = vmatpush1.msra.mxu0 0.0
    %272 = vmatprep.subr.mxu0 0.0
    %273 = vmatpush1.msra.mxu0 0.0
    %274 = vmatprep.subr.mxu0 0.0
    %275 = vmatpush1.msra.mxu0 0.0
    %276 = vmatprep.subr.mxu0 0.0
    %277 = vmatpush1.msra.mxu0 0.0
    %278 = vmatprep.subr.mxu0 0.0
    %279 = vmatpush1.msra.mxu0 0.0
    %280 = vmatprep.subr.mxu0 0.0
    %281 = vmatpush1.msra.mxu0 0.0
    %282 = vmatprep.subr.mxu0 0.0
    %283 = vmatpush1.msra.mxu0 0.0
    %284 = vmatprep.subr.mxu0 0.0
    %285 = vmatpush1.msra.mxu0 0.0
    %286 = vmatprep.subr.mxu0 0.0
    %287 = vmatpush1.msra.mxu0 0.0
    %288 = vmatprep.subr.mxu0 0.0
    %289 = vmatpush1.msra.mxu0 0.0
    %290 = vmatprep.subr.mxu0 0.0
    %291 = vmatpush1.msra.mxu0 0.0
    %292 = vmatprep.subr.mxu0 0.0
    %293 = vmatpush1.msra.mxu0 0.0
    %294 = vmatprep.subr.mxu0 0.0
    %295 = vmatpush1.msra.mxu0 0.0
    %296 = vmatprep.mubr.f32.mxu0 0.0
    %297 = vmatmul.mubr.f32.gmra.mrb[0].mxu0 %v230
    %v298 = vpop.f32.mrb[0].mxu0
    %v299 = vadd.f32 0.0, %v298
    %v300 = vpop.f32.mrb[0].mxu0
    %301 = vdwg.mxu0
    %v302 = vadd.f32 %v231, %v299
    %v303 = vtanh.pop %v302
    %v304 = vld [vmem:[#allocation2 + $0x10] sm:$0xff]
    %305 = vmatprep.subr.mxu0 0.0
    %306 = vmatpush1.msra.mxu0 %v213
    %307 = vmatprep.subr.mxu0 0.0
    %308 = vmatpush1.msra.mxu0 %v214
    %309 = vmatprep.subr.mxu0 0.0
    %310 = vmatpush1.msra.mxu0 %v215
    %311 = vmatprep.subr.mxu0 0.0
    %312 = vmatpush1.msra.mxu0 %v216
    %313 = vmatprep.subr.mxu0 0.0
    %314 = vmatpush1.msra.mxu0 %v217
    %315 = vmatprep.subr.mxu0 0.0
    %316 = vmatpush1.msra.mxu0 %v218
    %317 = vmatprep.subr.mxu0 0.0
    %318 = vmatpush1.msra.mxu0 %v219
    %319 = vmatprep.subr.mxu0 0.0
    %320 = vmatpush1.msra.mxu0 %v220
    %321 = vmatprep.subr.mxu0 0.0
    %322 = vmatpush1.msra.mxu0 %v221
    %323 = vmatprep.subr.mxu0 0.0
    %324 = vmatpush1.msra.mxu0 %v222
    %325 = vmatprep.subr.mxu0 0.0
    %326 = vmatpush1.msra.mxu0 %v223
    %327 = vmatprep.subr.mxu0 0.0
    %328 = vmatpush1.msra.mxu0 %v224
    %329 = vmatprep.subr.mxu0 0.0
    %330 = vmatpush1.msra.mxu0 %v225
    %331 = vmatprep.subr.mxu0 0.0
    %332 = vmatpush1.msra.mxu0 %v226
    %333 = vmatprep.subr.mxu0 0.0
    %334 = vmatpush1.msra.mxu0 %v227
    %335 = vmatprep.subr.mxu0 0.0
    %336 = vmatpush1.msra.mxu0 %v228
    %337 = vmatprep.subr.mxu0 0.0
    %338 = vmatpush1.msra.mxu0 0.0
    %339 = vmatprep.subr.mxu0 0.0
    %340 = vmatpush1.msra.mxu0 0.0
    %341 = vmatprep.subr.mxu0 0.0
    %342 = vmatpush1.msra.mxu0 0.0
    %343 = vmatprep.subr.mxu0 0.0
    %344 = vmatpush1.msra.mxu0 0.0
    %345 = vmatprep.subr.mxu0 0.0
    %346 = vmatpush1.msra.mxu0 0.0
    %347 = vmatprep.subr.mxu0 0.0
    %348 = vmatpush1.msra.mxu0 0.0
    %349 = vmatprep.subr.mxu0 0.0
    %350 = vmatpush1.msra.mxu0 0.0
    %351 = vmatprep.subr.mxu0 0.0
    %352 = vmatpush1.msra.mxu0 0.0
    %353 = vmatprep.subr.mxu0 0.0
    %354 = vmatpush1.msra.mxu0 0.0
    %355 = vmatprep.subr.mxu0 0.0
    %356 = vmatpush1.msra.mxu0 0.0
    %357 = vmatprep.subr.mxu0 0.0
    %358 = vmatpush1.msra.mxu0 0.0
    %359 = vmatprep.subr.mxu0 0.0
    %360 = vmatpush1.msra.mxu0 0.0
    %361 = vmatprep.subr.mxu0 0.0
    %362 = vmatpush1.msra.mxu0 0.0
    %363 = vmatprep.subr.mxu0 0.0
    %364 = vmatpush1.msra.mxu0 0.0
    %365 = vmatprep.subr.mxu0 0.0
    %366 = vmatpush1.msra.mxu0 0.0
    %367 = vmatprep.subr.mxu0 0.0
    %368 = vmatpush1.msra.mxu0 0.0
    %369 = vmatprep.mubr.f32.mxu0 0.0
    %370 = vmatmul.mubr.f32.gmra.mrb[0].mxu0 %v303
    %v371 = vpop.f32.mrb[0].mxu0
    %v372 = vadd.f32 0.0, %v371
    %v373 = vpop.f32.mrb[0].mxu0
    %374 = vdwg.mxu0
    %v375 = vadd.f32 %v304, %v372
    %v376 = vtanh.pop %v375
    %v377 = vld [vmem:[#allocation2 + $0x18] sm:$0xff]
    %378 = vmatprep.subr.mxu0 0.0
    %379 = vmatpush1.msra.mxu0 %v213
    %380 = vmatprep.subr.mxu0 0.0
    %381 = vmatpush1.msra.mxu0 %v214
    %382 = vmatprep.subr.mxu0 0.0
    %383 = vmatpush1.msra.mxu0 %v215
    %384 = vmatprep.subr.mxu0 0.0
    %385 = vmatpush1.msra.mxu0 %v216
    %386 = vmatprep.subr.mxu0 0.0
    %387 = vmatpush1.msra.mxu0 %v217
    %388 = vmatprep.subr.mxu0 0.0
    %389 = vmatpush1.msra.mxu0 %v218
    %390 = vmatprep.subr.mxu0 0.0
    %391 = vmatpush1.msra.mxu0 %v219
    %392 = vmatprep.subr.mxu0 0.0
    %393 = vmatpush1.msra.mxu0 %v220
    %394 = vmatprep.subr.mxu0 0.0
    %395 = vmatpush1.msra.mxu0 %v221
    %396 = vmatprep.subr.mxu0 0.0
    %397 = vmatpush1.msra.mxu0 %v222
    %398 = vmatprep.subr.mxu0 0.0
    %399 = vmatpush1.msra.mxu0 %v223
    %400 = vmatprep.subr.mxu0 0.0
    %401 = vmatpush1.msra.mxu0 %v224
    %402 = vmatprep.subr.mxu0 0.0
    %403 = vmatpush1.msra.mxu0 %v225
    %404 = vmatprep.subr.mxu0 0.0
    %405 = vmatpush1.msra.mxu0 %v226
    %406 = vmatprep.subr.mxu0 0.0
    %407 = vmatpush1.msra.mxu0 %v227
    %408 = vmatprep.subr.mxu0 0.0
    %409 = vmatpush1.msra.mxu0 %v228
    %410 = vmatprep.subr.mxu0 0.0
    %411 = vmatpush1.msra.mxu0 0.0
    %412 = vmatprep.subr.mxu0 0.0
    %413 = vmatpush1.msra.mxu0 0.0
    %414 = vmatprep.subr.mxu0 0.0
    %415 = vmatpush1.msra.mxu0 0.0
    %416 = vmatprep.subr.mxu0 0.0
    %417 = vmatpush1.msra.mxu0 0.0
    %418 = vmatprep.subr.mxu0 0.0
    %419 = vmatpush1.msra.mxu0 0.0
    %420 = vmatprep.subr.mxu0 0.0
    %421 = vmatpush1.msra.mxu0 0.0
    %422 = vmatprep.subr.mxu0 0.0
    %423 = vmatpush1.msra.mxu0 0.0
    %424 = vmatprep.subr.mxu0 0.0
    %425 = vmatpush1.msra.mxu0 0.0
    %426 = vmatprep.subr.mxu0 0.0
    %427 = vmatpush1.msra.mxu0 0.0
    %428 = vmatprep.subr.mxu0 0.0
    %429 = vmatpush1.msra.mxu0 0.0
    %430 = vmatprep.subr.mxu0 0.0
    %431 = vmatpush1.msra.mxu0 0.0
    %432 = vmatprep.subr.mxu0 0.0
    %433 = vmatpush1.msra.mxu0 0.0
    %434 = vmatprep.subr.mxu0 0.0
    %435 = vmatpush1.msra.mxu0 0.0
    %436 = vmatprep.subr.mxu0 0.0
    %437 = vmatpush1.msra.mxu0 0.0
    %438 = vmatprep.subr.mxu0 0.0
    %439 = vmatpush1.msra.mxu0 0.0
    %440 = vmatprep.subr.mxu0 0.0
    %441 = vmatpush1.msra.mxu0 0.0
    %442 = vmatprep.mubr.f32.mxu0 0.0
    %443 = vmatmul.mubr.f32.gmra.mrb[0].mxu0 %v376
    %v444 = vpop.f32.mrb[0].mxu0
    %v445 = vadd.f32 0.0, %v444
    %v446 = vpop.f32.mrb[0].mxu0
    %447 = vdwg.mxu0
    %v448 = vadd.f32 %v377, %v445
    %v449 = vtanh.pop %v448
    %v450 = vld [vmem:[#allocation2 + $0x20] sm:$0xff]
    %451 = vmatprep.subr.mxu0 0.0
    %452 = vmatpush1.msra.mxu0 %v213
    %453 = vmatprep.subr.mxu0 0.0
    %454 = vmatpush1.msra.mxu0 %v214
    %455 = vmatprep.subr.mxu0 0.0
    %456 = vmatpush1.msra.mxu0 %v215
    %457 = vmatprep.subr.mxu0 0.0
    %458 = vmatpush1.msra.mxu0 %v216
    %459 = vmatprep.subr.mxu0 0.0
    %460 = vmatpush1.msra.mxu0 %v217
    %461 = vmatprep.subr.mxu0 0.0
    %462 = vmatpush1.msra.mxu0 %v218
    %463 = vmatprep.subr.mxu0 0.0
    %464 = vmatpush1.msra.mxu0 %v219
    %465 = vmatprep.subr.mxu0 0.0
    %466 = vmatpush1.msra.mxu0 %v220
    %467 = vmatprep.subr.mxu0 0.0
    %468 = vmatpush1.msra.mxu0 %v221
    %469 = vmatprep.subr.mxu0 0.0
    %470 = vmatpush1.msra.mxu0 %v222
    %471 = vmatprep.subr.mxu0 0.0
    %472 = vmatpush1.msra.mxu0 %v223
    %473 = vmatprep.subr.mxu0 0.0
    %474 = vmatpush1.msra.mxu0 %v224
    %475 = vmatprep.subr.mxu0 0.0
    %476 = vmatpush1.msra.mxu0 %v225
    %477 = vmatprep.subr.mxu0 0.0
    %478 = vmatpush1.msra.mxu0 %v226
    %479 = vmatprep.subr.mxu0 0.0
    %480 = vmatpush1.msra.mxu0 %v227
    %481 = vmatprep.subr.mxu0 0.0
    %482 = vmatpush1.msra.mxu0 %v228
    %483 = vmatprep.subr.mxu0 0.0
    %484 = vmatpush1.msra.mxu0 0.0
    %485 = vmatprep.subr.mxu0 0.0
    %486 = vmatpush1.msra.mxu0 0.0
    %487 = vmatprep.subr.mxu0 0.0
    %488 = vmatpush1.msra.mxu0 0.0
    %489 = vmatprep.subr.mxu0 0.0
    %490 = vmatpush1.msra.mxu0 0.0
    %491 = vmatprep.subr.mxu0 0.0
    %492 = vmatpush1.msra.mxu0 0.0
    %493 = vmatprep.subr.mxu0 0.0
    %494 = vmatpush1.msra.mxu0 0.0
    %495 = vmatprep.subr.mxu0 0.0
    %496 = vmatpush1.msra.mxu0 0.0
    %497 = vmatprep.subr.mxu0 0.0
    %498 = vmatpush1.msra.mxu0 0.0
    %499 = vmatprep.subr.mxu0 0.0
    %500 = vmatpush1.msra.mxu0 0.0
    %501 = vmatprep.subr.mxu0 0.0
    %502 = vmatpush1.msra.mxu0 0.0
    %503 = vmatprep.subr.mxu0 0.0
    %504 = vmatpush1.msra.mxu0 0.0
    %505 = vmatprep.subr.mxu0 0.0
    %506 = vmatpush1.msra.mxu0 0.0
    %507 = vmatprep.subr.mxu0 0.0
    %508 = vmatpush1.msra.mxu0 0.0
    %509 = vmatprep.subr.mxu0 0.0
    %510 = vmatpush1.msra.mxu0 0.0
    %511 = vmatprep.subr.mxu0 0.0
    %512 = vmatpush1.msra.mxu0 0.0
    %513 = vmatprep.subr.mxu0 0.0
    %514 = vmatpush1.msra.mxu0 0.0
    %515 = vmatprep.mubr.f32.mxu0 0.0
    %516 = vmatmul.mubr.f32.gmra.mrb[0].mxu0 %v449
    %v517 = vpop.f32.mrb[0].mxu0
    %v518 = vadd.f32 0.0, %v517
    %v519 = vpop.f32.mrb[0].mxu0
    %520 = vdwg.mxu0
    %v521 = vadd.f32 %v450, %v518
    %v522 = vtanh.pop %v521
    %v523 = vld [vmem:[#allocation2 + $0x28] sm:$0xff]
    %524 = vmatprep.subr.mxu0 0.0
    %525 = vmatpush1.msra.mxu0 %v213
    %526 = vmatprep.subr.mxu0 0.0
    %527 = vmatpush1.msra.mxu0 %v214
    %528 = vmatprep.subr.mxu0 0.0
    %529 = vmatpush1.msra.mxu0 %v215
    %530 = vmatprep.subr.mxu0 0.0
    %531 = vmatpush1.msra.mxu0 %v216
    %532 = vmatprep.subr.mxu0 0.0
    %533 = vmatpush1.msra.mxu0 %v217
    %534 = vmatprep.subr.mxu0 0.0
    %535 = vmatpush1.msra.mxu0 %v218
    %536 = vmatprep.subr.mxu0 0.0
    %537 = vmatpush1.msra.mxu0 %v219
    %538 = vmatprep.subr.mxu0 0.0
    %539 = vmatpush1.msra.mxu0 %v220
    %540 = vmatprep.subr.mxu0 0.0
    %541 = vmatpush1.msra.mxu0 %v221
    %542 = vmatprep.subr.mxu0 0.0
    %543 = vmatpush1.msra.mxu0 %v222
    %544 = vmatprep.subr.mxu0 0.0
    %545 = vmatpush1.msra.mxu0 %v223
    %546 = vmatprep.subr.mxu0 0.0
    %547 = vmatpush1.msra.mxu0 %v224
    %548 = vmatprep.subr.mxu0 0.0
    %549 = vmatpush1.msra.mxu0 %v225
    %550 = vmatprep.subr.mxu0 0.0
    %551 = vmatpush1.msra.mxu0 %v226
    %552 = vmatprep.subr.mxu0 0.0
    %553 = vmatpush1.msra.mxu0 %v227
    %554 = vmatprep.subr.mxu0 0.0
    %555 = vmatpush1.msra.mxu0 %v228
    %556 = vmatprep.subr.mxu0 0.0
    %557 = vmatpush1.msra.mxu0 0.0
    %558 = vmatprep.subr.mxu0 0.0
    %559 = vmatpush1.msra.mxu0 0.0
    %560 = vmatprep.subr.mxu0 0.0
    %561 = vmatpush1.msra.mxu0 0.0
    %562 = vmatprep.subr.mxu0 0.0
    %563 = vmatpush1.msra.mxu0 0.0
    %564 = vmatprep.subr.mxu0 0.0
    %565 = vmatpush1.msra.mxu0 0.0
    %566 = vmatprep.subr.mxu0 0.0
    %567 = vmatpush1.msra.mxu0 0.0
    %568 = vmatprep.subr.mxu0 0.0
    %569 = vmatpush1.msra.mxu0 0.0
    %570 = vmatprep.subr.mxu0 0.0
    %571 = vmatpush1.msra.mxu0 0.0
    %572 = vmatprep.subr.mxu0 0.0
    %573 = vmatpush1.msra.mxu0 0.0
    %574 = vmatprep.subr.mxu0 0.0
    %575 = vmatpush1.msra.mxu0 0.0
    %576 = vmatprep.subr.mxu0 0.0
    %577 = vmatpush1.msra.mxu0 0.0
    %578 = vmatprep.subr.mxu0 0.0
    %579 = vmatpush1.msra.mxu0 0.0
    %580 = vmatprep.subr.mxu0 0.0
    %581 = vmatpush1.msra.mxu0 0.0
    %582 = vmatprep.subr.mxu0 0.0
    %583 = vmatpush1.msra.mxu0 0.0
    %584 = vmatprep.subr.mxu0 0.0
    %585 = vmatpush1.msra.mxu0 0.0
    %586 = vmatprep.subr.mxu0 0.0
    %587 = vmatpush1.msra.mxu0 0.0
    %588 = vmatprep.mubr.f32.mxu0 0.0
    %589 = vmatmul.mubr.f32.gmra.mrb[0].mxu0 %v522
    %v590 = vpop.f32.mrb[0].mxu0
    %v591 = vadd.f32 0.0, %v590
    %v592 = vpop.f32.mrb[0].mxu0
    %593 = vdwg.mxu0
    %v594 = vadd.f32 %v523, %v591
    %v595 = vtanh.pop %v594
    %v596 = vld [vmem:[#allocation2 + $0x30] sm:$0xff]
    %597 = vmatprep.subr.mxu0 0.0
    %598 = vmatpush1.msra.mxu0 %v213
    %599 = vmatprep.subr.mxu0 0.0
    %600 = vmatpush1.msra.mxu0 %v214
    %601 = vmatprep.subr.mxu0 0.0
    %602 = vmatpush1.msra.mxu0 %v215
    %603 = vmatprep.subr.mxu0 0.0
    %604 = vmatpush1.msra.mxu0 %v216
    %605 = vmatprep.subr.mxu0 0.0
    %606 = vmatpush1.msra.mxu0 %v217
    %607 = vmatprep.subr.mxu0 0.0
    %608 = vmatpush1.msra.mxu0 %v218
    %609 = vmatprep.subr.mxu0 0.0
    %610 = vmatpush1.msra.mxu0 %v219
    %611 = vmatprep.subr.mxu0 0.0
    %612 = vmatpush1.msra.mxu0 %v220
    %613 = vmatprep.subr.mxu0 0.0
    %614 = vmatpush1.msra.mxu0 %v221
    %615 = vmatprep.subr.mxu0 0.0
    %616 = vmatpush1.msra.mxu0 %v222
    %617 = vmatprep.subr.mxu0 0.0
    %618 = vmatpush1.msra.mxu0 %v223
    %619 = vmatprep.subr.mxu0 0.0
    %620 = vmatpush1.msra.mxu0 %v224
    %621 = vmatprep.subr.mxu0 0.0
    %622 = vmatpush1.msra.mxu0 %v225
    %623 = vmatprep.subr.mxu0 0.0
    %624 = vmatpush1.msra.mxu0 %v226
    %625 = vmatprep.subr.mxu0 0.0
    %626 = vmatpush1.msra.mxu0 %v227
    %627 = vmatprep.subr.mxu0 0.0
    %628 = vmatpush1.msra.mxu0 %v228
    %629 = vmatprep.subr.mxu0 0.0
    %630 = vmatpush1.msra.mxu0 0.0
    %631 = vmatprep.subr.mxu0 0.0
    %632 = vmatpush1.msra.mxu0 0.0
    %633 = vmatprep.subr.mxu0 0.0
    %634 = vmatpush1.msra.mxu0 0.0
    %635 = vmatprep.subr.mxu0 0.0
    %636 = vmatpush1.msra.mxu0 0.0
    %637 = vmatprep.subr.mxu0 0.0
    %638 = vmatpush1.msra.mxu0 0.0
    %639 = vmatprep.subr.mxu0 0.0
    %640 = vmatpush1.msra.mxu0 0.0
    %641 = vmatprep.subr.mxu0 0.0
    %642 = vmatpush1.msra.mxu0 0.0
    %643 = vmatprep.subr.mxu0 0.0
    %644 = vmatpush1.msra.mxu0 0.0
    %645 = vmatprep.subr.mxu0 0.0
    %646 = vmatpush1.msra.mxu0 0.0
    %647 = vmatprep.subr.mxu0 0.0
    %648 = vmatpush1.msra.mxu0 0.0
    %649 = vmatprep.subr.mxu0 0.0
    %650 = vmatpush1.msra.mxu0 0.0
    %651 = vmatprep.subr.mxu0 0.0
    %652 = vmatpush1.msra.mxu0 0.0
    %653 = vmatprep.subr.mxu0 0.0
    %654 = vmatpush1.msra.mxu0 0.0
    %655 = vmatprep.subr.mxu0 0.0
    %656 = vmatpush1.msra.mxu0 0.0
    %657 = vmatprep.subr.mxu0 0.0
    %658 = vmatpush1.msra.mxu0 0.0
    %659 = vmatprep.subr.mxu0 0.0
    %660 = vmatpush1.msra.mxu0 0.0
    %661 = vmatprep.mubr.f32.mxu0 0.0
    %662 = vmatmul.mubr.f32.gmra.mrb[0].mxu0 %v595
    %v663 = vpop.f32.mrb[0].mxu0
    %v664 = vadd.f32 0.0, %v663
    %v665 = vpop.f32.mrb[0].mxu0
    %666 = vdwg.mxu0
    %v667 = vadd.f32 %v596, %v664
    %v668 = vtanh.pop %v667
    %v669 = vld [vmem:[#allocation2 + $0x38] sm:$0xff]
    %670 = vmatprep.subr.mxu0 0.0
    %671 = vmatpush1.msra.mxu0 %v213
    %672 = vmatprep.subr.mxu0 0.0
    %673 = vmatpush1.msra.mxu0 %v214
    %674 = vmatprep.subr.mxu0 0.0
    %675 = vmatpush1.msra.mxu0 %v215
    %676 = vmatprep.subr.mxu0 0.0
    %677 = vmatpush1.msra.mxu0 %v216
    %678 = vmatprep.subr.mxu0 0.0
    %679 = vmatpush1.msra.mxu0 %v217
    %680 = vmatprep.subr.mxu0 0.0
    %681 = vmatpush1.msra.mxu0 %v218
    %682 = vmatprep.subr.mxu0 0.0
    %683 = vmatpush1.msra.mxu0 %v219
    %684 = vmatprep.subr.mxu0 0.0
    %685 = vmatpush1.msra.mxu0 %v220
    %686 = vmatprep.subr.mxu0 0.0
    %687 = vmatpush1.msra.mxu0 %v221
    %688 = vmatprep.subr.mxu0 0.0
    %689 = vmatpush1.msra.mxu0 %v222
    %690 = vmatprep.subr.mxu0 0.0
    %691 = vmatpush1.msra.mxu0 %v223
    %692 = vmatprep.subr.mxu0 0.0
    %693 = vmatpush1.msra.mxu0 %v224
    %694 = vmatprep.subr.mxu0 0.0
    %695 = vmatpush1.msra.mxu0 %v225
    %696 = vmatprep.subr.mxu0 0.0
    %697 = vmatpush1.msra.mxu0 %v226
    %698 = vmatprep.subr.mxu0 0.0
    %699 = vmatpush1.msra.mxu0 %v227
    %700 = vmatprep.subr.mxu0 0.0
    %701 = vmatpush1.msra.mxu0 %v228
    %702 = vmatprep.subr.mxu0 0.0
    %703 = vmatpush1.msra.mxu0 0.0
    %704 = vmatprep.subr.mxu0 0.0
    %705 = vmatpush1.msra.mxu0 0.0
    %706 = vmatprep.subr.mxu0 0.0
    %707 = vmatpush1.msra.mxu0 0.0
    %708 = vmatprep.subr.mxu0 0.0
    %709 = vmatpush1.msra.mxu0 0.0
    %710 = vmatprep.subr.mxu0 0.0
    %711 = vmatpush1.msra.mxu0 0.0
    %712 = vmatprep.subr.mxu0 0.0
    %713 = vmatpush1.msra.mxu0 0.0
    %714 = vmatprep.subr.mxu0 0.0
    %715 = vmatpush1.msra.mxu0 0.0
    %716 = vmatprep.subr.mxu0 0.0
    %717 = vmatpush1.msra.mxu0 0.0
    %718 = vmatprep.subr.mxu0 0.0
    %719 = vmatpush1.msra.mxu0 0.0
    %720 = vmatprep.subr.mxu0 0.0
    %721 = vmatpush1.msra.mxu0 0.0
    %722 = vmatprep.subr.mxu0 0.0
    %723 = vmatpush1.msra.mxu0 0.0
    %724 = vmatprep.subr.mxu0 0.0
    %725 = vmatpush1.msra.mxu0 0.0
    %726 = vmatprep.subr.mxu0 0.0
    %727 = vmatpush1.msra.mxu0 0.0
    %728 = vmatprep.subr.mxu0 0.0
    %729 = vmatpush1.msra.mxu0 0.0
    %730 = vmatprep.subr.mxu0 0.0
    %731 = vmatpush1.msra.mxu0 0.0
    %732 = vmatprep.subr.mxu0 0.0
    %733 = vmatpush1.msra.mxu0 0.0
    %734 = vmatprep.mubr.f32.mxu0 0.0
    %735 = vmatmul.mubr.f32.gmra.mrb[0].mxu0 %v668
    %v736 = vpop.f32.mrb[0].mxu0
    %v737 = vadd.f32 0.0, %v736
    %v738 = vpop.f32.mrb[0].mxu0
    %739 = vdwg.mxu0
    %v740 = vadd.f32 %v669, %v737
    %v741 = vtanh.pop %v740
    %v742 = vld [vmem:[#allocation6] sm:$0xff]
    %v743 = vld [vmem:[#allocation6 + $0x8] sm:$0xff]
    %v744 = vld [vmem:[#allocation6 + $0x10] sm:$0xff]
    %v745 = vld [vmem:[#allocation6 + $0x18] sm:$0xff]
    %v746 = vld [vmem:[#allocation6 + $0x20] sm:$0xff]
    %v747 = vld [vmem:[#allocation6 + $0x28] sm:$0xff]
    %v748 = vld [vmem:[#allocation6 + $0x30] sm:$0xff]
    %v749 = vld [vmem:[#allocation6 + $0x38] sm:$0xff]
    %v750 = vld [vmem:[#allocation6 + $0x40] sm:$0xff]
    %v751 = vld [vmem:[#allocation6 + $0x48] sm:$0xff]
    %v752 = vld [vmem:[#allocation6 + $0x50] sm:$0xff]
    %v753 = vld [vmem:[#allocation6 + $0x58] sm:$0xff]
    %v754 = vld [vmem:[#allocation6 + $0x60] sm:$0xff]
    %v755 = vld [vmem:[#allocation6 + $0x68] sm:$0xff]
    %v756 = vld [vmem:[#allocation6 + $0x70] sm:$0xff]
    %v757 = vld [vmem:[#allocation6 + $0x78] sm:$0xff]
    %v758 = vld [vmem:[%s5] sm:$0x1]
    %v760 = vlaneseq
    %v761 = vshrl.u32 %v760, 7
    %v762 = vsub.s32 0, %v761
    %v763 = vrot.slane %v758, %v762
    %765 = vmatprep.subr.mxu0 0.0
    %766 = vmatpush1.msra.mxu0 %v742
    %767 = vmatprep.subr.mxu0 0.0
    %768 = vmatpush1.msra.mxu0 %v743
    %769 = vmatprep.subr.mxu0 0.0
    %770 = vmatpush1.msra.mxu0 %v744
    %771 = vmatprep.subr.mxu0 0.0
    %772 = vmatpush1.msra.mxu0 %v745
    %773 = vmatprep.subr.mxu0 0.0
    %774 = vmatpush1.msra.mxu0 %v746
    %775 = vmatprep.subr.mxu0 0.0
    %776 = vmatpush1.msra.mxu0 %v747
    %777 = vmatprep.subr.mxu0 0.0
    %778 = vmatpush1.msra.mxu0 %v748
    %779 = vmatprep.subr.mxu0 0.0
    %780 = vmatpush1.msra.mxu0 %v749
    %781 = vmatprep.subr.mxu0 0.0
    %782 = vmatpush1.msra.mxu0 %v750
    %783 = vmatprep.subr.mxu0 0.0
    %784 = vmatpush1.msra.mxu0 %v751
    %785 = vmatprep.subr.mxu0 0.0
    %786 = vmatpush1.msra.mxu0 %v752
    %787 = vmatprep.subr.mxu0 0.0
    %788 = vmatpush1.msra.mxu0 %v753
    %789 = vmatprep.subr.mxu0 0.0
    %790 = vmatpush1.msra.mxu0 %v754
    %791 = vmatprep.subr.mxu0 0.0
    %792 = vmatpush1.msra.mxu0 %v755
    %793 = vmatprep.subr.mxu0 0.0
    %794 = vmatpush1.msra.mxu0 %v756
    %795 = vmatprep.subr.mxu0 0.0
    %796 = vmatpush1.msra.mxu0 %v757
    %797 = vmatprep.subr.mxu0 0.0
    %798 = vmatpush1.msra.mxu0 0.0
    %799 = vmatprep.subr.mxu0 0.0
    %800 = vmatpush1.msra.mxu0 0.0
    %801 = vmatprep.subr.mxu0 0.0
    %802 = vmatpush1.msra.mxu0 0.0
    %803 = vmatprep.subr.mxu0 0.0
    %804 = vmatpush1.msra.mxu0 0.0
    %805 = vmatprep.subr.mxu0 0.0
    %806 = vmatpush1.msra.mxu0 0.0
    %807 = vmatprep.subr.mxu0 0.0
    %808 = vmatpush1.msra.mxu0 0.0
    %809 = vmatprep.subr.mxu0 0.0
    %810 = vmatpush1.msra.mxu0 0.0
    %811 = vmatprep.subr.mxu0 0.0
    %812 = vmatpush1.msra.mxu0 0.0
    %813 = vmatprep.subr.mxu0 0.0
    %814 = vmatpush1.msra.mxu0 0.0
    %815 = vmatprep.subr.mxu0 0.0
    %816 = vmatpush1.msra.mxu0 0.0
    %817 = vmatprep.subr.mxu0 0.0
    %818 = vmatpush1.msra.mxu0 0.0
    %819 = vmatprep.subr.mxu0 0.0
    %820 = vmatpush1.msra.mxu0 0.0
    %821 = vmatprep.subr.mxu0 0.0
    %822 = vmatpush1.msra.mxu0 0.0
    %823 = vmatprep.subr.mxu0 0.0
    %824 = vmatpush1.msra.mxu0 0.0
    %825 = vmatprep.subr.mxu0 0.0
    %826 = vmatpush1.msra.mxu0 0.0
    %827 = vmatprep.subr.mxu0 0.0
    %828 = vmatpush1.msra.mxu0 0.0
    %829 = vmatprep.mubr.f32.mxu0 0.0
    %830 = vmatmul.mubr.f32.gmra.mrb[0].mxu0 %v741
    %v831 = vpop.f32.mrb[0].mxu0
    %v832 = vadd.f32 %v763, %v831
    %v833 = vpop.f32.mrb[0].mxu0
    %834 = vdwg.mxu0
    %835 = vst [vmem:[#allocation8] sm:$0xff] %v832
    // Predicated region
    $region34: #{rnn_forward.1} parent=1 // pred_check
      _
    $region35: #{rnn_forward.1} parent=1 // pred_check_branch
      %837 = sbr.rel (0) target = $region37
    $region36: #{rnn_forward.1} parent=1 // pred_region
      %s839 = ssub.s32 128, 128
      %840 = vsyncadd [#allocation5], %s839
      %s842 = sshll.u32 [#allocation8], 4
      %s843 = int_to_ptr.vmem [resolvable:$true] %s842
      %845 = dma.vmem_to_hbm [thread:$0]  %s843, 128, %s6, [#allocation5]
    $region37: #{rnn_forward.1} parent=1 // pred_fallthru
      _
    // Predicated region
    $region38: #{rnn_forward.1} parent=1 // pred_check
      _
    $region39: #{rnn_forward.1} parent=1 // pred_check_branch
      %847 = sbr.rel (0) target = $region41
    $region40: #{rnn_forward.1} parent=1 // pred_region
      %848 = dma.done [#allocation5], 128
    $region41: #{rnn_forward.1} parent=1 // pred_fallthru
      _
    %849 = vsyncpa [#allocation4], 1
    %850 = vsyncpa [#allocation7], 1
    %851 = vsyncpa [#allocation5], 1

</llo_original>
